<compile_context>
chip_gen: v7x
topology: tpu7x:2x2x1
jax: 0.10.0
libtpu: 0.0.40
codegen_flags: <defaults>
</compile_context>

<pallas_src>
from functools import partial
from itertools import combinations, permutations

import jax
import jax.numpy as jnp
from jax import lax
from jax.experimental import pallas as pl
from jax.experimental.pallas import tpu as pltpu

BETA = 5.0           # order-predicate sharpness
GAMMA = 5.0          # time-predicate sharpness
HALF_BETA = 0.5 * BETA
HALF_GAMMA = 0.5 * GAMMA

ML = 128             # lane width of the flattened-row slab
MAX_TILE_S = 2048    # sublane rows per DMA block (compute granularity is STRIP)


def _cdiv(a, b):
    return -(-a // b)


def _round_up(a, m):
    return _cdiv(a, m) * m


def clnn_kernel(x_ref, btau_ref, wmh_ref, gth_ref, wcch_ref, wdch_ref,
                scal_ref, o_ref, *, n_ev, strip):
    """x_ref: (N, TILE_S, 128) VMEM; scalar params in SMEM; o_ref: (TILE_S, 128).

    Inner strip loop keeps every temporary in vregs (VALU/EUP bound, not ld/st).
    """
    n_pred = n_ev * (n_ev - 1)

    # Hoist every SMEM scalar read out of the strip loop (one sld each).
    btau = [btau_ref[p] for p in range(n_pred)]
    wmh = [wmh_ref[p] for p in range(n_pred)]
    gth = [gth_ref[n] for n in range(n_ev)]
    wcch = [wcch_ref[n] for n in range(n_ev)]
    wdch = [wdch_ref[n] for n in range(n_ev)]
    s_ord_c = scal_ref[0]    # 1 - 0.5*sum(w_multi)
    s_wc_ord = scal_ref[1]   # conj order-literal weight
    s_conj_c = scal_ref[2]   # 1 - wc_ord - 0.5*sum(wc_clk)
    s_wd_ord = scal_ref[3]   # disj order-literal weight
    s_disj_c = scal_ref[4]   # 0.5*sum(wd_clk)
    s_a0 = scal_ref[5]       # normalised alpha_conj
    s_a1 = scal_ref[6]       # normalised alpha_disj

    pair_idx = {pr: k for k, pr in enumerate(permutations(range(n_ev), 2))}
    n_strips = o_ref.shape[0] // strip

    def strip_body(s, carry):
        r = pl.multiple_of(s * strip, strip)

        # Load each event-clock channel for this strip, pre-scaled by beta/2.
        xs = [x_ref[n, pl.ds(r, strip), :] for n in range(n_ev)]
        hbx = [HALF_BETA * c for c in xs]
        # Clock-predicate arguments reuse the same scaling when gamma == beta.
        hgx = hbx if HALF_GAMMA == HALF_BETA else [HALF_GAMMA * c for c in xs]

        # === 基础顺序关系 + 组合后的顺序关系 (soft-AND, folded affine) ====
        # rn_ords = clip((1 - 0.5*sum(wm)) + sum_p (0.5*wm_p) * tanh(z_p))
        ord_acc = None
        for i, j in combinations(range(n_ev), 2):
            d = hbx[i] - hbx[j]                       # shared by (i,j) and (j,i)
            p_ij = pair_idx[(i, j)]
            p_ji = pair_idx[(j, i)]
            t = (wmh[p_ij] * jnp.tanh(d - btau[p_ij])
                 + wmh[p_ji] * jnp.tanh(-d - btau[p_ji]))
            ord_acc = t if ord_acc is None else ord_acc + t
        rn_ords = jnp.clip(s_ord_c + ord_acc, 0.0, 1.0)

        # === 时间谓词 folded straight into conj/disj weighted sums =========
        conj_acc = s_conj_c + s_wc_ord * rn_ords
        disj_acc = s_disj_c + s_wd_ord * rn_ords
        for n in range(n_ev):
            t = jnp.tanh(hgx[n] - gth[n])             # single EUP push per clk
            conj_acc = conj_acc + wcch[n] * t
            disj_acc = disj_acc + wdch[n] * t

        # === 逻辑运算 + 最终选择 (Binary alpha blend) =======================
        conj = jnp.clip(conj_acc, 0.0, 1.0)
        disj = jnp.clip(disj_acc, 0.0, 1.0)
        o_ref[pl.ds(r, strip), :] = s_a0 * conj + s_a1 * disj
        return carry

    lax.fori_loop(0, n_strips, strip_body, 0, unroll=False)


def clnn_forward(x, params):
    B, T, N = x.shape
    P = N * (N - 1)
    M = B * T

    # ---- minimal layout plumbing ------------------------------------------
    # Pad the flattened row axis only to an 8*128 multiple (<= 1023 rows) and
    # fold cast + pad + channel-major transpose into one XLA copy.  No
    # TILE-granular pad: the ragged trailing grid block is masked by Pallas.
    MS = _cdiv(M, ML)
    MS_pad = _round_up(MS, 8)
    M_pad = MS_pad * ML

    x2 = x.reshape(M, N)
    if x2.dtype != jnp.float32:
        x2 = x2.astype(jnp.float32)
    x3 = jnp.pad(x2, ((0, M_pad - M), (0, 0))).T.reshape(N, MS_pad, ML)

    # ---- tiling -------------------------------------------------------------
    TILE_S = min(MAX_TILE_S, MS_pad)
    # v7x megacore: avoid a single-step grid when more than one strip exists so
    # the "parallel" axis can shard across both TensorCores.
    if MS_pad > 8 and _cdiv(MS_pad, TILE_S) == 1:
        TILE_S = max(8, _round_up(_cdiv(MS_pad, 2), 8))
    STRIP = 16 if TILE_S % 16 == 0 else 8
    grid = (_cdiv(MS_pad, TILE_S),)

    # ---- fold parameters into kernel-ready SMEM scalars ---------------------
    wm = params["w_multi"].reshape(-1).astype(jnp.float32)              # (P,)
    wcc = params["wc_clk"].reshape(-1).astype(jnp.float32)              # (N,)
    wdc = params["wd_clk"].reshape(-1).astype(jnp.float32)              # (N,)
    btau = (HALF_BETA * params["tau"].reshape(-1)).astype(jnp.float32)  # (P,)
    gth = (HALF_GAMMA * params["theta"].reshape(-1)).astype(jnp.float32)
    wmh = 0.5 * wm
    wcch = 0.5 * wcc
    wdch = 0.5 * wdc
    wc_ord = params["wc_ord"].reshape(())
    wd_ord = params["wd_ord"].reshape(())
    a0 = params["a0"].reshape(())
    a1 = params["a1"].reshape(())
    denom = jnp.maximum(a0 + a1, 1e-6)            # guard against a0+a1 -> 0
    scal = jnp.stack([
        1.0 - 0.5 * jnp.sum(wm),                  # [0] soft-AND constant
        wc_ord,                                   # [1] conj order-literal weight
        1.0 - wc_ord - 0.5 * jnp.sum(wcc),        # [2] conj constant
        wd_ord,                                   # [3] disj order-literal weight
        0.5 * jnp.sum(wdc),                       # [4] disj constant
        a0 / denom,                               # [5] normalised alpha_conj
        a1 / denom,                               # [6] normalised alpha_disj
    ]).astype(jnp.float32)

    smem_spec = pl.BlockSpec(memory_space=pltpu.MemorySpace.SMEM)

    # VMEM: double-buffered (N+1) f32 tiles -> size the limit to the need.
    block_bytes = (N + 1) * TILE_S * ML * 4
    vmem_limit = int(min(32 * 1024 * 1024, max(8 * 1024 * 1024, 4 * block_bytes)))

    flops_per_elem = N + P // 2 + 3 * P + 5 * N + 12
    cost = pl.CostEstimate(
        flops=int(M_pad) * flops_per_elem,
        transcendentals=int(M_pad) * (P + N),
        bytes_accessed=int(M_pad) * (N + 1) * 4,
    )

    out = pl.pallas_call(
        partial(clnn_kernel, n_ev=N, strip=STRIP),
        out_shape=jax.ShapeDtypeStruct((MS_pad, ML), jnp.float32),
        grid=grid,
        in_specs=[
            pl.BlockSpec((N, TILE_S, ML), lambda i: (0, i, 0)),   # x slab
            smem_spec,   # btau   (P,)
            smem_spec,   # 0.5*w_multi (P,)
            smem_spec,   # gtheta (N,)
            smem_spec,   # 0.5*wc_clk (N,)
            smem_spec,   # 0.5*wd_clk (N,)
            smem_spec,   # folded scalars (7,)
        ],
        out_specs=pl.BlockSpec((TILE_S, ML), lambda i: (i, 0)),
        compiler_params=pltpu.CompilerParams(
            dimension_semantics=("parallel",),
            vmem_limit_bytes=vmem_limit,
        ),
        cost_estimate=cost,
    )(x3, btau, wmh, gth, wcch, wdch, scal)

    return out.reshape(M_pad)[:M].reshape(B, T)


def clnn_reference(x, params):
    """Plain-JAX reference mirroring the module's soft-logic semantics."""
    B, T, N = x.shape
    x2 = x.reshape(B * T, N).astype(jnp.float32)
    d = x2 @ params["s1"] - x2 @ params["s2"]
    ords = jax.nn.sigmoid(BETA * (d - params["tau"]))
    rn_ords = jnp.clip(1.0 - (1.0 - ords) @ params["w_multi"], 0.0, 1.0)
    clk = jax.nn.sigmoid(GAMMA * (x2 - params["theta"]))
    conj = jnp.clip(1.0 - (params["wc_ord"] * (1.0 - rn_ords)
                           + (1.0 - clk) @ params["wc_clk"]), 0.0, 1.0)
    disj = jnp.clip(params["wd_ord"] * rn_ords + clk @ params["wd_clk"], 0.0, 1.0)
    a0, a1 = params["a0"], params["a1"]
    denom = jnp.maximum(a0 + a1, 1e-6)
    return ((a0 * conj + a1 * disj) / denom).reshape(B, T)


def init_params(N, key):
    """Deterministic parameter init (shapes implied by Model.__init__)."""
    P = N * (N - 1)
    pairs = list(permutations(range(N), 2))  # same order as the PyTorch loop
    s1 = jnp.zeros((N, P), jnp.float32)
    s2 = jnp.zeros((N, P), jnp.float32)
    for p, (i, j) in enumerate(pairs):
        s1 = s1.at[i, p].set(1.0)
        s2 = s2.at[j, p].set(1.0)

    k = jax.random.split(key, 8)
    return {
        "s1": s1,      # only used by the plain-JAX reference
        "s2": s2,
        # Order_module: one learned time threshold per ordered pair
        "tau": jax.random.uniform(k[0], (1, P), jnp.float32, -0.2, 0.2),
        # Multiorder_Module: weights in [0,1] (Clamp_proj)
        "w_multi": jax.random.uniform(k[1], (P, 1), jnp.float32, 0.0, 1.0),
        # Predicate_time: per-event clock thresholds
        "theta": jax.random.uniform(k[2], (1, N), jnp.float32, 0.2, 0.8),
        # TimeorderConj / TimeorderDisj: N+1 weights each, split as
        # [order-literal weight, clock-literal weights]
        "wc_ord": jax.random.uniform(k[3], (1, 1), jnp.float32, 0.0, 1.0),
        "wc_clk": jax.random.uniform(k[4], (N, 1), jnp.float32, 0.0, 1.0),
        "wd_ord": jax.random.uniform(k[5], (1, 1), jnp.float32, 0.0, 1.0),
        "wd_clk": jax.random.uniform(k[6], (N, 1), jnp.float32, 0.0, 1.0),
        # Binary: 2 selection weights (alpha), clamped to [0,1]
        "a0": jnp.full((1, 1), 0.6, jnp.float32),
        "a1": jnp.full((1, 1), 0.4, jnp.float32),
    }


if __name__ == "__main__":
    key = jax.random.PRNGKey(0)
    kx, kp, kx2 = jax.random.split(key, 3)

    # --- small shape matching the module's intent (batch, time, event types) --
    B, T, N = 2, 8, 4
    x = jax.random.uniform(kx, (B, T, N), jnp.float32)   # clock values in [0,1)
    params = init_params(N, kp)

    out = jax.block_until_ready(clnn_forward(x, params))
    ref = clnn_reference(x, params)
    assert out.shape == (B, T)
    assert jnp.allclose(out, ref, atol=1e-5, rtol=1e-5), "mismatch vs reference"

    # --- second shape exercising a multi-step grid + ragged trailing block ---
    B2, T2 = 4, 600
    x2 = jax.random.uniform(kx2, (B2, T2, N), jnp.float32)
    out2 = jax.block_until_ready(clnn_forward(x2, params))
    ref2 = clnn_reference(x2, params)
    assert out2.shape == (B2, T2)
    assert jnp.allclose(out2, ref2, atol=1e-5, rtol=1e-5), "mismatch vs reference (large)"

    print("KERNEL_OK")
</pallas_src>

<mosaic_0001>
module attributes {stable_mosaic.version = 11 : i64} {
  func.func @clnn_kernel(%arg0: i32, %arg1: memref<4x8x128xf32, #tpu.memory_space<vmem>>, %arg2: memref<12xf32, #tpu.memory_space<smem>>, %arg3: memref<12xf32, #tpu.memory_space<smem>>, %arg4: memref<4xf32, #tpu.memory_space<smem>>, %arg5: memref<4xf32, #tpu.memory_space<smem>>, %arg6: memref<4xf32, #tpu.memory_space<smem>>, %arg7: memref<7xf32, #tpu.memory_space<smem>>, %arg8: memref<8x128xf32, #tpu.memory_space<vmem>>) attributes {dimension_semantics = [#tpu.dimension_semantics<parallel>], iteration_bounds = array<i64: 1>, scalar_prefetch = 0 : i64, scratch_operands = 0 : i64, tpu.core_type = #tpu.core_type<tc>, window_params = [{transform_indices = @transform_0, window_bounds = array<i64: 4, 8, 128>}, {transform_indices = @transform_1, window_bounds = array<i64: 12>}, {transform_indices = @transform_2, window_bounds = array<i64: 12>}, {transform_indices = @transform_3, window_bounds = array<i64: 4>}, {transform_indices = @transform_4, window_bounds = array<i64: 4>}, {transform_indices = @transform_5, window_bounds = array<i64: 4>}, {transform_indices = @transform_6, window_bounds = array<i64: 7>}, {transform_indices = @transform_7, window_bounds = array<i64: 8, 128>}]} {
    %c0 = arith.constant 0 : index
    %0 = memref.load %arg2[%c0] : memref<12xf32, #tpu.memory_space<smem>>
    %c1 = arith.constant 1 : index
    %1 = memref.load %arg2[%c1] : memref<12xf32, #tpu.memory_space<smem>>
    %c2 = arith.constant 2 : index
    %2 = memref.load %arg2[%c2] : memref<12xf32, #tpu.memory_space<smem>>
    %c3 = arith.constant 3 : index
    %3 = memref.load %arg2[%c3] : memref<12xf32, #tpu.memory_space<smem>>
    %c4 = arith.constant 4 : index
    %4 = memref.load %arg2[%c4] : memref<12xf32, #tpu.memory_space<smem>>
    %c5 = arith.constant 5 : index
    %5 = memref.load %arg2[%c5] : memref<12xf32, #tpu.memory_space<smem>>
    %c6 = arith.constant 6 : index
    %6 = memref.load %arg2[%c6] : memref<12xf32, #tpu.memory_space<smem>>
    %c7 = arith.constant 7 : index
    %7 = memref.load %arg2[%c7] : memref<12xf32, #tpu.memory_space<smem>>
    %c8 = arith.constant 8 : index
    %8 = memref.load %arg2[%c8] : memref<12xf32, #tpu.memory_space<smem>>
    %c9 = arith.constant 9 : index
    %9 = memref.load %arg2[%c9] : memref<12xf32, #tpu.memory_space<smem>>
    %c10 = arith.constant 10 : index
    %10 = memref.load %arg2[%c10] : memref<12xf32, #tpu.memory_space<smem>>
    %c11 = arith.constant 11 : index
    %11 = memref.load %arg2[%c11] : memref<12xf32, #tpu.memory_space<smem>>
    %c0_0 = arith.constant 0 : index
    %12 = memref.load %arg3[%c0_0] : memref<12xf32, #tpu.memory_space<smem>>
    %c1_1 = arith.constant 1 : index
    %13 = memref.load %arg3[%c1_1] : memref<12xf32, #tpu.memory_space<smem>>
    %c2_2 = arith.constant 2 : index
    %14 = memref.load %arg3[%c2_2] : memref<12xf32, #tpu.memory_space<smem>>
    %c3_3 = arith.constant 3 : index
    %15 = memref.load %arg3[%c3_3] : memref<12xf32, #tpu.memory_space<smem>>
    %c4_4 = arith.constant 4 : index
    %16 = memref.load %arg3[%c4_4] : memref<12xf32, #tpu.memory_space<smem>>
    %c5_5 = arith.constant 5 : index
    %17 = memref.load %arg3[%c5_5] : memref<12xf32, #tpu.memory_space<smem>>
    %c6_6 = arith.constant 6 : index
    %18 = memref.load %arg3[%c6_6] : memref<12xf32, #tpu.memory_space<smem>>
    %c7_7 = arith.constant 7 : index
    %19 = memref.load %arg3[%c7_7] : memref<12xf32, #tpu.memory_space<smem>>
    %c8_8 = arith.constant 8 : index
    %20 = memref.load %arg3[%c8_8] : memref<12xf32, #tpu.memory_space<smem>>
    %c9_9 = arith.constant 9 : index
    %21 = memref.load %arg3[%c9_9] : memref<12xf32, #tpu.memory_space<smem>>
    %c10_10 = arith.constant 10 : index
    %22 = memref.load %arg3[%c10_10] : memref<12xf32, #tpu.memory_space<smem>>
    %c11_11 = arith.constant 11 : index
    %23 = memref.load %arg3[%c11_11] : memref<12xf32, #tpu.memory_space<smem>>
    %c0_12 = arith.constant 0 : index
    %24 = memref.load %arg4[%c0_12] : memref<4xf32, #tpu.memory_space<smem>>
    %c1_13 = arith.constant 1 : index
    %25 = memref.load %arg4[%c1_13] : memref<4xf32, #tpu.memory_space<smem>>
    %c2_14 = arith.constant 2 : index
    %26 = memref.load %arg4[%c2_14] : memref<4xf32, #tpu.memory_space<smem>>
    %c3_15 = arith.constant 3 : index
    %27 = memref.load %arg4[%c3_15] : memref<4xf32, #tpu.memory_space<smem>>
    %c0_16 = arith.constant 0 : index
    %28 = memref.load %arg5[%c0_16] : memref<4xf32, #tpu.memory_space<smem>>
    %c1_17 = arith.constant 1 : index
    %29 = memref.load %arg5[%c1_17] : memref<4xf32, #tpu.memory_space<smem>>
    %c2_18 = arith.constant 2 : index
    %30 = memref.load %arg5[%c2_18] : memref<4xf32, #tpu.memory_space<smem>>
    %c3_19 = arith.constant 3 : index
    %31 = memref.load %arg5[%c3_19] : memref<4xf32, #tpu.memory_space<smem>>
    %c0_20 = arith.constant 0 : index
    %32 = memref.load %arg6[%c0_20] : memref<4xf32, #tpu.memory_space<smem>>
    %c1_21 = arith.constant 1 : index
    %33 = memref.load %arg6[%c1_21] : memref<4xf32, #tpu.memory_space<smem>>
    %c2_22 = arith.constant 2 : index
    %34 = memref.load %arg6[%c2_22] : memref<4xf32, #tpu.memory_space<smem>>
    %c3_23 = arith.constant 3 : index
    %35 = memref.load %arg6[%c3_23] : memref<4xf32, #tpu.memory_space<smem>>
    %c0_24 = arith.constant 0 : index
    %36 = memref.load %arg7[%c0_24] : memref<7xf32, #tpu.memory_space<smem>>
    %c1_25 = arith.constant 1 : index
    %37 = memref.load %arg7[%c1_25] : memref<7xf32, #tpu.memory_space<smem>>
    %c2_26 = arith.constant 2 : index
    %38 = memref.load %arg7[%c2_26] : memref<7xf32, #tpu.memory_space<smem>>
    %c3_27 = arith.constant 3 : index
    %39 = memref.load %arg7[%c3_27] : memref<7xf32, #tpu.memory_space<smem>>
    %c4_28 = arith.constant 4 : index
    %40 = memref.load %arg7[%c4_28] : memref<7xf32, #tpu.memory_space<smem>>
    %c5_29 = arith.constant 5 : index
    %41 = memref.load %arg7[%c5_29] : memref<7xf32, #tpu.memory_space<smem>>
    %c6_30 = arith.constant 6 : index
    %42 = memref.load %arg7[%c6_30] : memref<7xf32, #tpu.memory_space<smem>>
    %c0_i32 = arith.constant 0 : i32
    %c8_i32 = arith.constant 8 : i32
    %43 = arith.muli %c0_i32, %c8_i32 : i32
    %44 = tpu.assume_multiple %43, 8 : i32
    %c0_31 = arith.constant 0 : index
    %45 = arith.index_cast %44 : i32 to index
    %c0_32 = arith.constant 0 : index
    %46 = vector.load %arg1[%c0_31, %45, %c0_32] : memref<4x8x128xf32, #tpu.memory_space<vmem>>, vector<1x8x128xf32>
    %47 = vector.shape_cast %46 : vector<1x8x128xf32> to vector<8x128xf32>
    %c1_33 = arith.constant 1 : index
    %48 = arith.index_cast %44 : i32 to index
    %c0_34 = arith.constant 0 : index
    %49 = vector.load %arg1[%c1_33, %48, %c0_34] : memref<4x8x128xf32, #tpu.memory_space<vmem>>, vector<1x8x128xf32>
    %50 = vector.shape_cast %49 : vector<1x8x128xf32> to vector<8x128xf32>
    %c2_35 = arith.constant 2 : index
    %51 = arith.index_cast %44 : i32 to index
    %c0_36 = arith.constant 0 : index
    %52 = vector.load %arg1[%c2_35, %51, %c0_36] : memref<4x8x128xf32, #tpu.memory_space<vmem>>, vector<1x8x128xf32>
    %53 = vector.shape_cast %52 : vector<1x8x128xf32> to vector<8x128xf32>
    %c3_37 = arith.constant 3 : index
    %54 = arith.index_cast %44 : i32 to index
    %c0_38 = arith.constant 0 : index
    %55 = vector.load %arg1[%c3_37, %54, %c0_38] : memref<4x8x128xf32, #tpu.memory_space<vmem>>, vector<1x8x128xf32>
    %56 = vector.shape_cast %55 : vector<1x8x128xf32> to vector<8x128xf32>
    %cst = arith.constant 2.500000e+00 : f32
    %57 = vector.broadcast %cst : f32 to vector<8x128xf32>
    %58 = arith.mulf %57, %47 : vector<8x128xf32>
    %cst_39 = arith.constant 2.500000e+00 : f32
    %59 = vector.broadcast %cst_39 : f32 to vector<8x128xf32>
    %60 = arith.mulf %59, %50 : vector<8x128xf32>
    %cst_40 = arith.constant 2.500000e+00 : f32
    %61 = vector.broadcast %cst_40 : f32 to vector<8x128xf32>
    %62 = arith.mulf %61, %53 : vector<8x128xf32>
    %cst_41 = arith.constant 2.500000e+00 : f32
    %63 = vector.broadcast %cst_41 : f32 to vector<8x128xf32>
    %64 = arith.mulf %63, %56 : vector<8x128xf32>
    %65 = arith.subf %58, %60 : vector<8x128xf32>
    %66 = vector.broadcast %0 : f32 to vector<8x128xf32>
    %67 = arith.subf %65, %66 : vector<8x128xf32>
    %68 = math.tanh %67 : vector<8x128xf32>
    %69 = vector.broadcast %12 : f32 to vector<8x128xf32>
    %70 = arith.mulf %69, %68 : vector<8x128xf32>
    %cst_42 = arith.constant 0.000000e+00 : f32
    %71 = vector.broadcast %cst_42 : f32 to vector<8x128xf32>
    %72 = arith.subf %71, %65 : vector<8x128xf32>
    %73 = vector.broadcast %3 : f32 to vector<8x128xf32>
    %74 = arith.subf %72, %73 : vector<8x128xf32>
    %75 = math.tanh %74 : vector<8x128xf32>
    %76 = vector.broadcast %15 : f32 to vector<8x128xf32>
    %77 = arith.mulf %76, %75 : vector<8x128xf32>
    %78 = arith.addf %70, %77 : vector<8x128xf32>
    %79 = arith.subf %58, %62 : vector<8x128xf32>
    %80 = vector.broadcast %1 : f32 to vector<8x128xf32>
    %81 = arith.subf %79, %80 : vector<8x128xf32>
    %82 = math.tanh %81 : vector<8x128xf32>
    %83 = vector.broadcast %13 : f32 to vector<8x128xf32>
    %84 = arith.mulf %83, %82 : vector<8x128xf32>
    %cst_43 = arith.constant 0.000000e+00 : f32
    %85 = vector.broadcast %cst_43 : f32 to vector<8x128xf32>
    %86 = arith.subf %85, %79 : vector<8x128xf32>
    %87 = vector.broadcast %6 : f32 to vector<8x128xf32>
    %88 = arith.subf %86, %87 : vector<8x128xf32>
    %89 = math.tanh %88 : vector<8x128xf32>
    %90 = vector.broadcast %18 : f32 to vector<8x128xf32>
    %91 = arith.mulf %90, %89 : vector<8x128xf32>
    %92 = arith.addf %84, %91 : vector<8x128xf32>
    %93 = arith.addf %78, %92 : vector<8x128xf32>
    %94 = arith.subf %58, %64 : vector<8x128xf32>
    %95 = vector.broadcast %2 : f32 to vector<8x128xf32>
    %96 = arith.subf %94, %95 : vector<8x128xf32>
    %97 = math.tanh %96 : vector<8x128xf32>
    %98 = vector.broadcast %14 : f32 to vector<8x128xf32>
    %99 = arith.mulf %98, %97 : vector<8x128xf32>
    %cst_44 = arith.constant 0.000000e+00 : f32
    %100 = vector.broadcast %cst_44 : f32 to vector<8x128xf32>
    %101 = arith.subf %100, %94 : vector<8x128xf32>
    %102 = vector.broadcast %9 : f32 to vector<8x128xf32>
    %103 = arith.subf %101, %102 : vector<8x128xf32>
    %104 = math.tanh %103 : vector<8x128xf32>
    %105 = vector.broadcast %21 : f32 to vector<8x128xf32>
    %106 = arith.mulf %105, %104 : vector<8x128xf32>
    %107 = arith.addf %99, %106 : vector<8x128xf32>
    %108 = arith.addf %93, %107 : vector<8x128xf32>
    %109 = arith.subf %60, %62 : vector<8x128xf32>
    %110 = vector.broadcast %4 : f32 to vector<8x128xf32>
    %111 = arith.subf %109, %110 : vector<8x128xf32>
    %112 = math.tanh %111 : vector<8x128xf32>
    %113 = vector.broadcast %16 : f32 to vector<8x128xf32>
    %114 = arith.mulf %113, %112 : vector<8x128xf32>
    %cst_45 = arith.constant 0.000000e+00 : f32
    %115 = vector.broadcast %cst_45 : f32 to vector<8x128xf32>
    %116 = arith.subf %115, %109 : vector<8x128xf32>
    %117 = vector.broadcast %7 : f32 to vector<8x128xf32>
    %118 = arith.subf %116, %117 : vector<8x128xf32>
    %119 = math.tanh %118 : vector<8x128xf32>
    %120 = vector.broadcast %19 : f32 to vector<8x128xf32>
    %121 = arith.mulf %120, %119 : vector<8x128xf32>
    %122 = arith.addf %114, %121 : vector<8x128xf32>
    %123 = arith.addf %108, %122 : vector<8x128xf32>
    %124 = arith.subf %60, %64 : vector<8x128xf32>
    %125 = vector.broadcast %5 : f32 to vector<8x128xf32>
    %126 = arith.subf %124, %125 : vector<8x128xf32>
    %127 = math.tanh %126 : vector<8x128xf32>
    %128 = vector.broadcast %17 : f32 to vector<8x128xf32>
    %129 = arith.mulf %128, %127 : vector<8x128xf32>
    %cst_46 = arith.constant 0.000000e+00 : f32
    %130 = vector.broadcast %cst_46 : f32 to vector<8x128xf32>
    %131 = arith.subf %130, %124 : vector<8x128xf32>
    %132 = vector.broadcast %10 : f32 to vector<8x128xf32>
    %133 = arith.subf %131, %132 : vector<8x128xf32>
    %134 = math.tanh %133 : vector<8x128xf32>
    %135 = vector.broadcast %22 : f32 to vector<8x128xf32>
    %136 = arith.mulf %135, %134 : vector<8x128xf32>
    %137 = arith.addf %129, %136 : vector<8x128xf32>
    %138 = arith.addf %123, %137 : vector<8x128xf32>
    %139 = arith.subf %62, %64 : vector<8x128xf32>
    %140 = vector.broadcast %8 : f32 to vector<8x128xf32>
    %141 = arith.subf %139, %140 : vector<8x128xf32>
    %142 = math.tanh %141 : vector<8x128xf32>
    %143 = vector.broadcast %20 : f32 to vector<8x128xf32>
    %144 = arith.mulf %143, %142 : vector<8x128xf32>
    %cst_47 = arith.constant 0.000000e+00 : f32
    %145 = vector.broadcast %cst_47 : f32 to vector<8x128xf32>
    %146 = arith.subf %145, %139 : vector<8x128xf32>
    %147 = vector.broadcast %11 : f32 to vector<8x128xf32>
    %148 = arith.subf %146, %147 : vector<8x128xf32>
    %149 = math.tanh %148 : vector<8x128xf32>
    %150 = vector.broadcast %23 : f32 to vector<8x128xf32>
    %151 = arith.mulf %150, %149 : vector<8x128xf32>
    %152 = arith.addf %144, %151 : vector<8x128xf32>
    %153 = arith.addf %138, %152 : vector<8x128xf32>
    %154 = vector.broadcast %36 : f32 to vector<8x128xf32>
    %155 = arith.addf %154, %153 : vector<8x128xf32>
    %cst_48 = arith.constant 0.000000e+00 : f32
    %cst_49 = arith.constant 1.000000e+00 : f32
    %156 = vector.broadcast %cst_48 : f32 to vector<8x128xf32>
    %157 = arith.maximumf %156, %155 : vector<8x128xf32>
    %158 = vector.broadcast %cst_49 : f32 to vector<8x128xf32>
    %159 = arith.minimumf %158, %157 : vector<8x128xf32>
    %160 = vector.broadcast %37 : f32 to vector<8x128xf32>
    %161 = arith.mulf %160, %159 : vector<8x128xf32>
    %162 = vector.broadcast %38 : f32 to vector<8x128xf32>
    %163 = arith.addf %162, %161 : vector<8x128xf32>
    %164 = vector.broadcast %39 : f32 to vector<8x128xf32>
    %165 = arith.mulf %164, %159 : vector<8x128xf32>
    %166 = vector.broadcast %40 : f32 to vector<8x128xf32>
    %167 = arith.addf %166, %165 : vector<8x128xf32>
    %168 = vector.broadcast %24 : f32 to vector<8x128xf32>
    %169 = arith.subf %58, %168 : vector<8x128xf32>
    %170 = math.tanh %169 : vector<8x128xf32>
    %171 = vector.broadcast %28 : f32 to vector<8x128xf32>
    %172 = arith.mulf %171, %170 : vector<8x128xf32>
    %173 = arith.addf %163, %172 : vector<8x128xf32>
    %174 = vector.broadcast %32 : f32 to vector<8x128xf32>
    %175 = arith.mulf %174, %170 : vector<8x128xf32>
    %176 = arith.addf %167, %175 : vector<8x128xf32>
    %177 = vector.broadcast %25 : f32 to vector<8x128xf32>
    %178 = arith.subf %60, %177 : vector<8x128xf32>
    %179 = math.tanh %178 : vector<8x128xf32>
    %180 = vector.broadcast %29 : f32 to vector<8x128xf32>
    %181 = arith.mulf %180, %179 : vector<8x128xf32>
    %182 = arith.addf %173, %181 : vector<8x128xf32>
    %183 = vector.broadcast %33 : f32 to vector<8x128xf32>
    %184 = arith.mulf %183, %179 : vector<8x128xf32>
    %185 = arith.addf %176, %184 : vector<8x128xf32>
    %186 = vector.broadcast %26 : f32 to vector<8x128xf32>
    %187 = arith.subf %62, %186 : vector<8x128xf32>
    %188 = math.tanh %187 : vector<8x128xf32>
    %189 = vector.broadcast %30 : f32 to vector<8x128xf32>
    %190 = arith.mulf %189, %188 : vector<8x128xf32>
    %191 = arith.addf %182, %190 : vector<8x128xf32>
    %192 = vector.broadcast %34 : f32 to vector<8x128xf32>
    %193 = arith.mulf %192, %188 : vector<8x128xf32>
    %194 = arith.addf %185, %193 : vector<8x128xf32>
    %195 = vector.broadcast %27 : f32 to vector<8x128xf32>
    %196 = arith.subf %64, %195 : vector<8x128xf32>
    %197 = math.tanh %196 : vector<8x128xf32>
    %198 = vector.broadcast %31 : f32 to vector<8x128xf32>
    %199 = arith.mulf %198, %197 : vector<8x128xf32>
    %200 = arith.addf %191, %199 : vector<8x128xf32>
    %201 = vector.broadcast %35 : f32 to vector<8x128xf32>
    %202 = arith.mulf %201, %197 : vector<8x128xf32>
    %203 = arith.addf %194, %202 : vector<8x128xf32>
    %cst_50 = arith.constant 0.000000e+00 : f32
    %cst_51 = arith.constant 1.000000e+00 : f32
    %204 = vector.broadcast %cst_50 : f32 to vector<8x128xf32>
    %205 = arith.maximumf %204, %200 : vector<8x128xf32>
    %206 = vector.broadcast %cst_51 : f32 to vector<8x128xf32>
    %207 = arith.minimumf %206, %205 : vector<8x128xf32>
    %cst_52 = arith.constant 0.000000e+00 : f32
    %cst_53 = arith.constant 1.000000e+00 : f32
    %208 = vector.broadcast %cst_52 : f32 to vector<8x128xf32>
    %209 = arith.maximumf %208, %203 : vector<8x128xf32>
    %210 = vector.broadcast %cst_53 : f32 to vector<8x128xf32>
    %211 = arith.minimumf %210, %209 : vector<8x128xf32>
    %212 = vector.broadcast %41 : f32 to vector<8x128xf32>
    %213 = arith.mulf %212, %207 : vector<8x128xf32>
    %214 = vector.broadcast %42 : f32 to vector<8x128xf32>
    %215 = arith.mulf %214, %211 : vector<8x128xf32>
    %216 = arith.addf %213, %215 : vector<8x128xf32>
    %217 = arith.index_cast %44 : i32 to index
    %c0_54 = arith.constant 0 : index
    %218 = vector.load %arg8[%217, %c0_54] : memref<8x128xf32, #tpu.memory_space<vmem>>, vector<8x128xf32>
    tpu.vector_store %arg8[%217, %c0_54], %216 {strides = array<i32>} : memref<8x128xf32, #tpu.memory_space<vmem>>, vector<8x128xf32>,
    %c1_i32 = arith.constant 1 : i32
    return
  }
  func.func @transform_0(%arg0: i32) -> (i32, i32, i32) {
    %c0_i32 = arith.constant 0 : i32
    %c0_i32_0 = arith.constant 0 : i32
    %c0_i32_1 = arith.constant 0 : i32
    return %c0_i32, %arg0, %c0_i32_0 : i32, i32, i32
  }
  func.func @transform_1(%arg0: i32) -> i32 {
    %c0_i32 = arith.constant 0 : i32
    %c0_i32_0 = arith.constant 0 : i32
    return %c0_i32 : i32
  }
  func.func @transform_2(%arg0: i32) -> i32 {
    %c0_i32 = arith.constant 0 : i32
    %c0_i32_0 = arith.constant 0 : i32
    return %c0_i32 : i32
  }
  func.func @transform_3(%arg0: i32) -> i32 {
    %c0_i32 = arith.constant 0 : i32
    %c0_i32_0 = arith.constant 0 : i32
    return %c0_i32 : i32
  }
  func.func @transform_4(%arg0: i32) -> i32 {
    %c0_i32 = arith.constant 0 : i32
    %c0_i32_0 = arith.constant 0 : i32
    return %c0_i32 : i32
  }
  func.func @transform_5(%arg0: i32) -> i32 {
    %c0_i32 = arith.constant 0 : i32
    %c0_i32_0 = arith.constant 0 : i32
    return %c0_i32 : i32
  }
  func.func @transform_6(%arg0: i32) -> i32 {
    %c0_i32 = arith.constant 0 : i32
    %c0_i32_0 = arith.constant 0 : i32
    return %c0_i32 : i32
  }
  func.func @transform_7(%arg0: i32) -> (i32, i32) {
    %c0_i32 = arith.constant 0 : i32
    %c0_i32_0 = arith.constant 0 : i32
    return %arg0, %c0_i32 : i32, i32
  }
}

</mosaic_0001>

<llo_original>
// kernel: tpu_custom_call.1
$region0: #{tpu_custom_call.1}
  #allocation0 [shape = 'u32[]', space=smem, size = 0x4, offset = 0x4, fixed_abs, tag = 'smem constant byte address 0x4 - core index']
  #allocation1 [shape = 'u32[144,128]{1,0:T(1,128)}', space=vmem, size = 0x12000, scoped, tag = 'internal scratch']
  %s0 = inlined_call_operand.hbm [shape: f32[4,8,128], index: 0, kind: input, shape index: {}]
  %s1 = inlined_call_operand.vmem [shape: f32[12], index: 1, kind: input, shape index: {}]
  %s2 = inlined_call_operand.vmem [shape: f32[12], index: 2, kind: input, shape index: {}]
  %s3 = inlined_call_operand.vmem [shape: f32[4], index: 3, kind: input, shape index: {}]
  %s4 = inlined_call_operand.vmem [shape: f32[4], index: 4, kind: input, shape index: {}]
  %s5 = inlined_call_operand.vmem [shape: f32[4], index: 5, kind: input, shape index: {}]
  %s6 = inlined_call_operand.vmem [shape: f32[7], index: 6, kind: input, shape index: {}]
  %s7 = inlined_call_operand.hbm [shape: f32[8,128], index: 7, kind: output, shape index: {}]
  %s8 = sld [smem:[#allocation0]]
  $region66: #{tpu_custom_call.1} parent=0
    _
  %s10 = ssub.s32 1, %s8
  %s11 = scalar_select 0, %s10, %s8
  $region1: #{tpu_custom_call.1} parent=0
    #allocation2 [shape = 'u8[16384]{0}', space=vmem, size = 0x4000, scoped, tag = 'input window, operand 0, single buffered']
    #allocation3 [shape = 's32[1]{0}', space=sflag, size = 0x4, scoped, tag = 'scoped memory for tpu_custom_call.1']
    #allocation4 [shape = 's32[1]{0}', space=sflag, size = 0x4, scoped, tag = 'scoped memory for tpu_custom_call.1']
    #allocation5 [shape = 's32[1]{0}', space=sflag, size = 0x4, scoped, tag = 'scoped memory for tpu_custom_call.1']
    #allocation6 [shape = 'u8[512]{0}', space=smem, size = 0x200, scoped, tag = 'input window, operand 1, single buffered']
    #allocation7 [shape = 'u8[512]{0}', space=smem, size = 0x200, scoped, tag = 'input window, operand 2, single buffered']
    #allocation8 [shape = 's32[1]{0}', space=sflag, size = 0x4, scoped, tag = 'scoped memory for tpu_custom_call.1']
    #allocation9 [shape = 'u8[512]{0}', space=smem, size = 0x200, scoped, tag = 'input window, operand 3, single buffered']
    #allocation10 [shape = 'u8[512]{0}', space=smem, size = 0x200, scoped, tag = 'input window, operand 4, single buffered']
    #allocation11 [shape = 's32[1]{0}', space=sflag, size = 0x4, scoped, tag = 'scoped memory for tpu_custom_call.1']
    #allocation12 [shape = 'u8[512]{0}', space=smem, size = 0x200, scoped, tag = 'input window, operand 5, single buffered']
    #allocation13 [shape = 'u8[512]{0}', space=smem, size = 0x200, scoped, tag = 'input window, operand 6, single buffered']
    #allocation14 [shape = 's32[1]{0}', space=sflag, size = 0x4, scoped, tag = 'scoped memory for tpu_custom_call.1']
    #allocation15 [shape = 'u8[4096]{0}', space=vmem, size = 0x1000, scoped, tag = 'output window, operand 0, single buffered']
    %12 = vsyncpa [#allocation3], 0
    %13 = vsyncpa [#allocation5], 0
    %14 = vsyncpa [#allocation8], 0
    %15 = vsyncpa [#allocation11], 0
    %16 = vsyncpa [#allocation14], 0
    %17 = vsyncpa [#allocation4], 0
    // Predicated region
    $region2: #{tpu_custom_call.1} parent=1 // pred_check
      _
    $region3: #{tpu_custom_call.1} parent=1 // pred_check_branch
      %19 = sbr.rel (0) target = $region5
    $region4: #{tpu_custom_call.1} parent=1 // pred_region
      %s21 = ssub.s32 512, 512
      %22 = vsyncadd [#allocation3], %s21
      %s23 = sshll.u32 [#allocation2], 4
      %s24 = int_to_ptr.vmem [resolvable:$true] %s23
      %29 = dma.hbm_to_vmem [thread:$0]  %s0, 512, %s24, [#allocation3], 128, 128, 8
    $region5: #{tpu_custom_call.1} parent=1 // pred_fallthru
      _
    // Predicated region
    $region6: #{tpu_custom_call.1} parent=1 // pred_check
      _
    $region7: #{tpu_custom_call.1} parent=1 // pred_check_branch
      %31 = sbr.rel (0) target = $region9
    $region8: #{tpu_custom_call.1} parent=1 // pred_region
      %s33 = ssub.s32 16, 16
      %34 = vsyncadd [#allocation5], %s33
      %s36 = sshll.u32 %s1, 4
      %s37 = int_to_ptr.vmem [resolvable:$true] %s36
      %39 = dma.vmem_to_smem %s37, 16, [#allocation6], [#allocation5]
    $region9: #{tpu_custom_call.1} parent=1 // pred_fallthru
      _
    // Predicated region
    $region10: #{tpu_custom_call.1} parent=1 // pred_check
      _
    $region11: #{tpu_custom_call.1} parent=1 // pred_check_branch
      %41 = sbr.rel (0) target = $region13
    $region12: #{tpu_custom_call.1} parent=1 // pred_region
      %s43 = ssub.s32 16, 16
      %44 = vsyncadd [#allocation8], %s43
      %s46 = sshll.u32 %s2, 4
      %s47 = int_to_ptr.vmem [resolvable:$true] %s46
      %49 = dma.vmem_to_smem %s47, 16, [#allocation7], [#allocation8]
    $region13: #{tpu_custom_call.1} parent=1 // pred_fallthru
      _
    // Predicated region
    $region14: #{tpu_custom_call.1} parent=1 // pred_check
      _
    $region15: #{tpu_custom_call.1} parent=1 // pred_check_branch
      %51 = sbr.rel (0) target = $region17
    $region16: #{tpu_custom_call.1} parent=1 // pred_region
      %s53 = ssub.s32 16, 16
      %54 = vsyncadd [#allocation8], %s53
      %s56 = sshll.u32 %s3, 4
      %s57 = int_to_ptr.vmem [resolvable:$true] %s56
      %59 = dma.vmem_to_smem %s57, 16, [#allocation9], [#allocation8]
    $region17: #{tpu_custom_call.1} parent=1 // pred_fallthru
      _
    // Predicated region
    $region18: #{tpu_custom_call.1} parent=1 // pred_check
      _
    $region19: #{tpu_custom_call.1} parent=1 // pred_check_branch
      %61 = sbr.rel (0) target = $region21
    $region20: #{tpu_custom_call.1} parent=1 // pred_region
      %s63 = ssub.s32 16, 16
      %64 = vsyncadd [#allocation11], %s63
      %s66 = sshll.u32 %s4, 4
      %s67 = int_to_ptr.vmem [resolvable:$true] %s66
      %69 = dma.vmem_to_smem %s67, 16, [#allocation10], [#allocation11]
    $region21: #{tpu_custom_call.1} parent=1 // pred_fallthru
      _
    // Predicated region
    $region22: #{tpu_custom_call.1} parent=1 // pred_check
      _
    $region23: #{tpu_custom_call.1} parent=1 // pred_check_branch
      %71 = sbr.rel (0) target = $region25
    $region24: #{tpu_custom_call.1} parent=1 // pred_region
      %s73 = ssub.s32 16, 16
      %74 = vsyncadd [#allocation11], %s73
      %s76 = sshll.u32 %s5, 4
      %s77 = int_to_ptr.vmem [resolvable:$true] %s76
      %79 = dma.vmem_to_smem %s77, 16, [#allocation12], [#allocation11]
    $region25: #{tpu_custom_call.1} parent=1 // pred_fallthru
      _
    // Predicated region
    $region26: #{tpu_custom_call.1} parent=1 // pred_check
      _
    $region27: #{tpu_custom_call.1} parent=1 // pred_check_branch
      %81 = sbr.rel (0) target = $region29
    $region28: #{tpu_custom_call.1} parent=1 // pred_region
      %s83 = ssub.s32 16, 16
      %84 = vsyncadd [#allocation14], %s83
      %s86 = sshll.u32 %s6, 4
      %s87 = int_to_ptr.vmem [resolvable:$true] %s86
      %89 = dma.vmem_to_smem %s87, 16, [#allocation13], [#allocation14]
    $region29: #{tpu_custom_call.1} parent=1 // pred_fallthru
      _
    // Predicated region
    $region30: #{tpu_custom_call.1} parent=1 // pred_check
      _
    $region31: #{tpu_custom_call.1} parent=1 // pred_check_branch
      %91 = sbr.rel (0) target = $region33
    $region32: #{tpu_custom_call.1} parent=1 // pred_region
      %92 = dma.done [#allocation3], 512
    $region33: #{tpu_custom_call.1} parent=1 // pred_fallthru
      _
    // Predicated region
    $region34: #{tpu_custom_call.1} parent=1 // pred_check
      _
    $region35: #{tpu_custom_call.1} parent=1 // pred_check_branch
      %94 = sbr.rel (0) target = $region37
    $region36: #{tpu_custom_call.1} parent=1 // pred_region
      %95 = dma.done [#allocation5], 16
    $region37: #{tpu_custom_call.1} parent=1 // pred_fallthru
      _
    // Predicated region
    $region38: #{tpu_custom_call.1} parent=1 // pred_check
      _
    $region39: #{tpu_custom_call.1} parent=1 // pred_check_branch
      %97 = sbr.rel (0) target = $region41
    $region40: #{tpu_custom_call.1} parent=1 // pred_region
      %98 = dma.done [#allocation8], 16
    $region41: #{tpu_custom_call.1} parent=1 // pred_fallthru
      _
    // Predicated region
    $region42: #{tpu_custom_call.1} parent=1 // pred_check
      _
    $region43: #{tpu_custom_call.1} parent=1 // pred_check_branch
      %100 = sbr.rel (0) target = $region45
    $region44: #{tpu_custom_call.1} parent=1 // pred_region
      %101 = dma.done [#allocation8], 16
    $region45: #{tpu_custom_call.1} parent=1 // pred_fallthru
      _
    // Predicated region
    $region46: #{tpu_custom_call.1} parent=1 // pred_check
      _
    $region47: #{tpu_custom_call.1} parent=1 // pred_check_branch
      %103 = sbr.rel (0) target = $region49
    $region48: #{tpu_custom_call.1} parent=1 // pred_region
      %104 = dma.done [#allocation11], 16
    $region49: #{tpu_custom_call.1} parent=1 // pred_fallthru
      _
    // Predicated region
    $region50: #{tpu_custom_call.1} parent=1 // pred_check
      _
    $region51: #{tpu_custom_call.1} parent=1 // pred_check_branch
      %106 = sbr.rel (0) target = $region53
    $region52: #{tpu_custom_call.1} parent=1 // pred_region
      %107 = dma.done [#allocation11], 16
    $region53: #{tpu_custom_call.1} parent=1 // pred_fallthru
      _
    // Predicated region
    $region54: #{tpu_custom_call.1} parent=1 // pred_check
      _
    $region55: #{tpu_custom_call.1} parent=1 // pred_check_branch
      %109 = sbr.rel (0) target = $region57
    $region56: #{tpu_custom_call.1} parent=1 // pred_region
      %110 = dma.done [#allocation14], 16
    $region57: #{tpu_custom_call.1} parent=1 // pred_fallthru
      _
    %111 = sfence
    %s112 = sld [smem:[#allocation6]]
    %s113 = sld [smem:[#allocation6 + $0x1]]
    %s114 = sld [smem:[#allocation6 + $0x2]]
    %s115 = sld [smem:[#allocation6 + $0x3]]
    %s116 = sld [smem:[#allocation6 + $0x4]]
    %s117 = sld [smem:[#allocation6 + $0x5]]
    %s118 = sld [smem:[#allocation6 + $0x6]]
    %s119 = sld [smem:[#allocation6 + $0x7]]
    %s120 = sld [smem:[#allocation6 + $0x8]]
    %s121 = sld [smem:[#allocation6 + $0x9]]
    %s122 = sld [smem:[#allocation6 + $0xa]]
    %s123 = sld [smem:[#allocation6 + $0xb]]
    %s124 = sld [smem:[#allocation7]]
    %s125 = sld [smem:[#allocation7 + $0x1]]
    %s126 = sld [smem:[#allocation7 + $0x2]]
    %s127 = sld [smem:[#allocation7 + $0x3]]
    %s128 = sld [smem:[#allocation7 + $0x4]]
    %s129 = sld [smem:[#allocation7 + $0x5]]
    %s130 = sld [smem:[#allocation7 + $0x6]]
    %s131 = sld [smem:[#allocation7 + $0x7]]
    %s132 = sld [smem:[#allocation7 + $0x8]]
    %s133 = sld [smem:[#allocation7 + $0x9]]
    %s134 = sld [smem:[#allocation7 + $0xa]]
    %s135 = sld [smem:[#allocation7 + $0xb]]
    %s136 = sld [smem:[#allocation9]]
    %s137 = sld [smem:[#allocation9 + $0x1]]
    %s138 = sld [smem:[#allocation9 + $0x2]]
    %s139 = sld [smem:[#allocation9 + $0x3]]
    %s140 = sld [smem:[#allocation10]]
    %s141 = sld [smem:[#allocation10 + $0x1]]
    %s142 = sld [smem:[#allocation10 + $0x2]]
    %s143 = sld [smem:[#allocation10 + $0x3]]
    %s144 = sld [smem:[#allocation12]]
    %s145 = sld [smem:[#allocation12 + $0x1]]
    %s146 = sld [smem:[#allocation12 + $0x2]]
    %s147 = sld [smem:[#allocation12 + $0x3]]
    %s148 = sld [smem:[#allocation13]]
    %s149 = sld [smem:[#allocation13 + $0x1]]
    %s150 = sld [smem:[#allocation13 + $0x2]]
    %s151 = sld [smem:[#allocation13 + $0x3]]
    %s152 = sld [smem:[#allocation13 + $0x4]]
    %s153 = sld [smem:[#allocation13 + $0x5]]
    %s154 = sld [smem:[#allocation13 + $0x6]]
    %v155 = vld [vmem:[#allocation2] sm:$0xff]
    %s156 = sadd.s32 0, 8
    %s157 = scalar_lea.vmem [#allocation2], %s156
    %v158 = vld [vmem:[%s157] sm:$0xff]
    %s159 = sadd.s32 0, 16
    %s160 = scalar_lea.vmem [#allocation2], %s159
    %v161 = vld [vmem:[%s160] sm:$0xff]
    %s162 = sadd.s32 0, 24
    %s163 = scalar_lea.vmem [#allocation2], %s162
    %v164 = vld [vmem:[%s163] sm:$0xff]
    %v165 = vmul.f32 %v155, 2.5
    %v166 = vmul.f32 %v158, 2.5
    %v167 = vmul.f32 %v161, 2.5
    %v168 = vmul.f32 %v164, 2.5
    %v169 = vsub.f32 %v165, %v166
    %v170 = vstv %s112
    %v171 = vsub.f32 %v169, %v170
    %v172 = vtanh.pop %v171
    %v173 = vstv %s124
    %v174 = vmul.f32 %v173, %v172
    %v175 = vsub.f32 0.0, %v169
    %v176 = vstv %s115
    %v177 = vsub.f32 %v175, %v176
    %v178 = vtanh.pop %v177
    %v179 = vstv %s127
    %v180 = vmul.f32 %v179, %v178
    %v181 = vadd.f32 %v174, %v180
    %v182 = vsub.f32 %v165, %v167
    %v183 = vstv %s113
    %v184 = vsub.f32 %v182, %v183
    %v185 = vtanh.pop %v184
    %v186 = vstv %s125
    %v187 = vmul.f32 %v186, %v185
    %v188 = vsub.f32 0.0, %v182
    %v189 = vstv %s118
    %v190 = vsub.f32 %v188, %v189
    %v191 = vtanh.pop %v190
    %v192 = vstv %s130
    %v193 = vmul.f32 %v192, %v191
    %v194 = vadd.f32 %v187, %v193
    %v195 = vadd.f32 %v181, %v194
    %v196 = vsub.f32 %v165, %v168
    %v197 = vstv %s114
    %v198 = vsub.f32 %v196, %v197
    %v199 = vtanh.pop %v198
    %v200 = vstv %s126
    %v201 = vmul.f32 %v200, %v199
    %v202 = vsub.f32 0.0, %v196
    %v203 = vstv %s121
    %v204 = vsub.f32 %v202, %v203
    %v205 = vtanh.pop %v204
    %v206 = vstv %s133
    %v207 = vmul.f32 %v206, %v205
    %v208 = vadd.f32 %v201, %v207
    %v209 = vadd.f32 %v195, %v208
    %v210 = vsub.f32 %v166, %v167
    %v211 = vstv %s116
    %v212 = vsub.f32 %v210, %v211
    %v213 = vtanh.pop %v212
    %v214 = vstv %s128
    %v215 = vmul.f32 %v214, %v213
    %v216 = vsub.f32 0.0, %v210
    %v217 = vstv %s119
    %v218 = vsub.f32 %v216, %v217
    %v219 = vtanh.pop %v218
    %v220 = vstv %s131
    %v221 = vmul.f32 %v220, %v219
    %v222 = vadd.f32 %v215, %v221
    %v223 = vadd.f32 %v209, %v222
    %v224 = vsub.f32 %v166, %v168
    %v225 = vstv %s117
    %v226 = vsub.f32 %v224, %v225
    %v227 = vtanh.pop %v226
    %v228 = vstv %s129
    %v229 = vmul.f32 %v228, %v227
    %v230 = vsub.f32 0.0, %v224
    %v231 = vstv %s122
    %v232 = vsub.f32 %v230, %v231
    %v233 = vtanh.pop %v232
    %v234 = vstv %s134
    %v235 = vmul.f32 %v234, %v233
    %v236 = vadd.f32 %v229, %v235
    %v237 = vadd.f32 %v223, %v236
    %v238 = vsub.f32 %v167, %v168
    %v239 = vstv %s120
    %v240 = vsub.f32 %v238, %v239
    %v241 = vtanh.pop %v240
    %v242 = vstv %s132
    %v243 = vmul.f32 %v242, %v241
    %v244 = vsub.f32 0.0, %v238
    %v245 = vstv %s123
    %v246 = vsub.f32 %v244, %v245
    %v247 = vtanh.pop %v246
    %v248 = vstv %s135
    %v249 = vmul.f32 %v248, %v247
    %v250 = vadd.f32 %v243, %v249
    %v251 = vadd.f32 %v237, %v250
    %v252 = vstv %s148
    %v253 = vadd.f32 %v252, %v251
    %v254 = vmax.f32 %v253, 0.0
    %v255 = vmin.f32 %v254, 1.0
    %v256 = vstv %s149
    %v257 = vmul.f32 %v256, %v255
    %v258 = vstv %s150
    %v259 = vadd.f32 %v258, %v257
    %v260 = vstv %s151
    %v261 = vmul.f32 %v260, %v255
    %v262 = vstv %s152
    %v263 = vadd.f32 %v262, %v261
    %v264 = vstv %s136
    %v265 = vsub.f32 %v165, %v264
    %v266 = vtanh.pop %v265
    %v267 = vstv %s140
    %v268 = vmul.f32 %v267, %v266
    %v269 = vadd.f32 %v259, %v268
    %v270 = vstv %s144
    %v271 = vmul.f32 %v270, %v266
    %v272 = vadd.f32 %v263, %v271
    %v273 = vstv %s137
    %v274 = vsub.f32 %v166, %v273
    %v275 = vtanh.pop %v274
    %v276 = vstv %s141
    %v277 = vmul.f32 %v276, %v275
    %v278 = vadd.f32 %v269, %v277
    %v279 = vstv %s145
    %v280 = vmul.f32 %v279, %v275
    %v281 = vadd.f32 %v272, %v280
    %v282 = vstv %s138
    %v283 = vsub.f32 %v167, %v282
    %v284 = vtanh.pop %v283
    %v285 = vstv %s142
    %v286 = vmul.f32 %v285, %v284
    %v287 = vadd.f32 %v278, %v286
    %v288 = vstv %s146
    %v289 = vmul.f32 %v288, %v284
    %v290 = vadd.f32 %v281, %v289
    %v291 = vstv %s139
    %v292 = vsub.f32 %v168, %v291
    %v293 = vtanh.pop %v292
    %v294 = vstv %s143
    %v295 = vmul.f32 %v294, %v293
    %v296 = vadd.f32 %v287, %v295
    %v297 = vstv %s147
    %v298 = vmul.f32 %v297, %v293
    %v299 = vadd.f32 %v290, %v298
    %v300 = vmax.f32 %v296, 0.0
    %v301 = vmin.f32 %v300, 1.0
    %v302 = vmax.f32 %v299, 0.0
    %v303 = vmin.f32 %v302, 1.0
    %v304 = vstv %s153
    %v305 = vmul.f32 %v304, %v301
    %v306 = vstv %s154
    %v307 = vmul.f32 %v306, %v303
    %v308 = vadd.f32 %v305, %v307
    %309 = vst [vmem:[#allocation15] sm:$0xff] %v308
    // Predicated region
    $region58: #{tpu_custom_call.1} parent=1 // pred_check
      _
    $region59: #{tpu_custom_call.1} parent=1 // pred_check_branch
      %311 = sbr.rel (0) target = $region61
    $region60: #{tpu_custom_call.1} parent=1 // pred_region
      %s313 = ssub.s32 128, 128
      %314 = vsyncadd [#allocation4], %s313
      %s316 = sshll.u32 [#allocation15], 4
      %s317 = int_to_ptr.vmem [resolvable:$true] %s316
      %319 = dma.vmem_to_hbm [thread:$0]  %s317, 128, %s7, [#allocation4]
    $region61: #{tpu_custom_call.1} parent=1 // pred_fallthru
      _
    // Predicated region
    $region62: #{tpu_custom_call.1} parent=1 // pred_check
      _
    $region63: #{tpu_custom_call.1} parent=1 // pred_check_branch
      %321 = sbr.rel (0) target = $region65
    $region64: #{tpu_custom_call.1} parent=1 // pred_region
      %322 = dma.done [#allocation4], 128
    $region65: #{tpu_custom_call.1} parent=1 // pred_fallthru
      _
    %323 = vsyncpa [#allocation3], 1
    %324 = vsyncpa [#allocation4], 1
    %325 = vsyncpa [#allocation5], 1
    %326 = vsyncpa [#allocation8], 1
    %327 = vsyncpa [#allocation11], 1
    %328 = vsyncpa [#allocation14], 1

</llo_original>
